<compile_context>
chip_gen: v5e
topology: v5e:2x2
jax: 0.10.0
libtpu: 0.0.40
codegen_flags: <defaults>
</compile_context>

<pallas_src>
import jax
import jax.numpy as jnp
from jax.experimental import pallas as pl
from jax.experimental.pallas import tpu as pltpu

# Layer widths of deeperDQN: Linear(1,16) ... Linear(16,10)
LAYER_DIMS = [1, 16, 32, 64, 128, 64, 32, 16, 10]
N_LAYERS = len(LAYER_DIMS) - 1   # 8
PAD = 128                        # lane padding for every feature dim


def mlp_kernel(x_ref, w_ref, b_ref, out_ref):
    """x_ref: (bm, 1) f32, w_ref: (8, PAD, PAD) bf16,
    b_ref: (9, PAD) f32 (rows 0..7 = biases, row 8 = layer-0 weight row),
    out_ref: (bm, PAD) f32."""
    # ---- Layer 0: Linear(1, 16) on the VPU (fan_in == 1 -> no MXU work) ----
    #   h[m, n] = x[m, 0] * W0[0, n] + b0[n]
    x = x_ref[...]                                     # (bm, 1) f32
    w0_row = b_ref[N_LAYERS:N_LAYERS + 1, :]           # (1, PAD) f32, W0[0,:] padded
    h = x * w0_row + b_ref[0:1, :]                     # (bm, PAD) f32, broadcast
    h = jnp.maximum(h, 0.0)                            # ReLU; Dropout == identity (eval)

    # ---- Layers 1..7 on the MXU (bf16 inputs, f32 accumulation) ----
    for i in range(1, N_LAYERS):
        # Keep the weight load inside the loop: one (128,128) bf16 tile live
        # at a time (the 64-vreg file cannot hold the whole stack).
        w = w_ref[i]                                   # (PAD, PAD) bf16
        b = b_ref[i:i + 1, :]                          # (1, PAD) f32, broadcasts
        acc = jnp.dot(h.astype(jnp.bfloat16), w,
                      preferred_element_type=jnp.float32)   # MXU, f32 accum
        h = acc + b                                    # f32 bias add (VPU)
        if i < N_LAYERS - 1:
            h = jnp.maximum(h, 0.0)                    # ReLU; Dropout == identity
        else:
            h = jax.nn.sigmoid(h)                      # final Sigmoid (f32, EUP)
    out_ref[...] = h


def init_params(key):
    """PyTorch-default-style init (U(-1/sqrt(fan_in), 1/sqrt(fan_in))), deterministic."""
    params = []
    for li in range(N_LAYERS):
        fan_in, fan_out = LAYER_DIMS[li], LAYER_DIMS[li + 1]
        key, kw, kb = jax.random.split(key, 3)
        bound = 1.0 / (fan_in ** 0.5)
        w = jax.random.uniform(kw, (fan_in, fan_out), jnp.float32, -bound, bound)
        b = jax.random.uniform(kb, (fan_out,), jnp.float32, -bound, bound)
        params.append((w, b))
    return params


def pack_params(params):
    """Pack parameters for the kernel.

    Returns:
      w_stack: (8, PAD, PAD) bf16 zero-padded weights (the layer-0 entry is
               unused by the kernel: layer 0 runs on the VPU from b_stack row 8).
      b_stack: (9, PAD) f32 -- rows 0..7 are zero-padded biases, row 8 holds
               the layer-0 weight row W0[0, :] in full f32 for the VPU path.
    """
    w_stack = jnp.zeros((N_LAYERS, PAD, PAD), jnp.float32)
    b_stack = jnp.zeros((N_LAYERS + 1, PAD), jnp.float32)
    for i, (w, b) in enumerate(params):
        w_stack = w_stack.at[i, : w.shape[0], : w.shape[1]].set(w)
        b_stack = b_stack.at[i, : b.shape[0]].set(b)
    w0 = params[0][0]                                    # (1, 16) f32
    b_stack = b_stack.at[N_LAYERS, : w0.shape[1]].set(w0[0])
    return w_stack.astype(jnp.bfloat16), b_stack


def _choose_bm(batch):
    """Pick the batch tile (rows per grid step)."""
    b8 = -(-batch // 8) * 8                  # sublane-aligned batch
    if b8 <= 256:
        return b8                            # tiny batch: one small tile
    # Large batch: 256..1024-row tiles, and >= 2 tiles total so that
    # dimension_semantics=("parallel",) shards across v7x's two TensorCores.
    half = -(-b8 // 2)
    bm = -(-half // 256) * 256               # round half-batch up to 256 rows
    return min(bm, 1024)


def deeper_dqn_forward(x, w_stack, b_stack):
    """x: (B, 1) float32  ->  (B, 10) float32 (matches nn.Module eval forward)."""
    B = x.shape[0]
    bm = _choose_bm(B)
    b_pad = -(-B // bm) * bm
    x_p = jnp.zeros((b_pad, 1), jnp.float32).at[:B, :].set(x)   # tiny: b_pad*4 bytes

    out = pl.pallas_call(
        mlp_kernel,
        out_shape=jax.ShapeDtypeStruct((b_pad, PAD), jnp.float32),
        grid=(b_pad // bm,),
        in_specs=[
            # x tile: 1-lane block is legal (last dim equals full array dim).
            pl.BlockSpec((bm, 1), lambda i: (i, 0)),
            # Weight / bias stacks: constant index_map -> VMEM-resident across tiles.
            pl.BlockSpec((N_LAYERS, PAD, PAD), lambda i: (0, 0, 0)),
            pl.BlockSpec((N_LAYERS + 1, PAD), lambda i: (0, 0)),
        ],
        out_specs=pl.BlockSpec((bm, PAD), lambda i: (i, 0)),
        compiler_params=pltpu.CompilerParams(
            dimension_semantics=("parallel",)),
    )(x_p, w_stack, b_stack)
    return out[:B, : LAYER_DIMS[-1]]


def reference_forward(x, params):
    h = x
    for i, (w, b) in enumerate(params):
        h = h @ w + b
        h = jnp.maximum(h, 0.0) if i < N_LAYERS - 1 else jax.nn.sigmoid(h)
    return h


if __name__ == "__main__":
    key = jax.random.PRNGKey(0)
    key, kx, kx2 = jax.random.split(key, 3)
    params = init_params(key)
    w_stack, b_stack = pack_params(params)

    # deeperDQN takes scalar state inputs: x is (batch, 1). Small shape first.
    x = jax.random.normal(kx, (2, 1), jnp.float32)
    y = jax.block_until_ready(deeper_dqn_forward(x, w_stack, b_stack))
    y_ref = reference_forward(x, params)
    assert y.shape == (2, 10)
    # bf16 MXU weights -> loosened tolerance vs f32 reference (sigmoid outputs in [0,1])
    assert jnp.allclose(y, y_ref, atol=1e-2, rtol=1e-2), "mismatch vs reference (B=2)"

    # Exercise the multi-tile grid path (bm=256, grid=2 -> v7x 2-TC sharding).
    x2 = jax.random.normal(kx2, (260, 1), jnp.float32)
    y2 = jax.block_until_ready(deeper_dqn_forward(x2, w_stack, b_stack))
    y2_ref = reference_forward(x2, params)
    assert y2.shape == (260, 10)
    assert jnp.allclose(y2, y2_ref, atol=1e-2, rtol=1e-2), "mismatch vs reference (B=260)"

    print("KERNEL_OK")
</pallas_src>

<mosaic_0001>
module attributes {stable_mosaic.version = 11 : i64} {
  func.func @mlp_kernel(%arg0: i32, %arg1: memref<8x1xf32, #tpu.memory_space<vmem>>, %arg2: memref<8x128x128xbf16, #tpu.memory_space<vmem>>, %arg3: memref<9x128xf32, #tpu.memory_space<vmem>>, %arg4: memref<8x128xf32, #tpu.memory_space<vmem>>) attributes {dimension_semantics = [#tpu.dimension_semantics<parallel>], iteration_bounds = array<i64: 1>, scalar_prefetch = 0 : i64, scratch_operands = 0 : i64, tpu.core_type = #tpu.core_type<tc>, window_params = [{transform_indices = @transform_0, window_bounds = array<i64: 8, 1>}, {pipeline_mode = #tpu.pipeline_mode<synchronous>, transform_indices = @transform_1, window_bounds = array<i64: 8, 128, 128>}, {pipeline_mode = #tpu.pipeline_mode<synchronous>, transform_indices = @transform_2, window_bounds = array<i64: 9, 128>}, {transform_indices = @transform_3, window_bounds = array<i64: 8, 128>}]} {
    %c0 = arith.constant 0 : index
    %c0_0 = arith.constant 0 : index
    %0 = vector.load %arg1[%c0, %c0_0] : memref<8x1xf32, #tpu.memory_space<vmem>>, vector<8x1xf32>
    %c8 = arith.constant 8 : index
    %c0_1 = arith.constant 0 : index
    %1 = vector.load %arg3[%c8, %c0_1] : memref<9x128xf32, #tpu.memory_space<vmem>>, vector<1x128xf32>
    %2 = vector.broadcast %0 : vector<8x1xf32> to vector<8x128xf32>
    %3 = vector.broadcast %1 : vector<1x128xf32> to vector<8x128xf32>
    %4 = arith.mulf %2, %3 : vector<8x128xf32>
    %c0_2 = arith.constant 0 : index
    %c0_3 = arith.constant 0 : index
    %5 = vector.load %arg3[%c0_2, %c0_3] : memref<9x128xf32, #tpu.memory_space<vmem>>, vector<1x128xf32>
    %6 = vector.broadcast %5 : vector<1x128xf32> to vector<8x128xf32>
    %7 = arith.addf %4, %6 : vector<8x128xf32>
    %cst = arith.constant 0.000000e+00 : f32
    %8 = vector.broadcast %cst : f32 to vector<8x128xf32>
    %9 = arith.maximumf %7, %8 : vector<8x128xf32>
    %c1 = arith.constant 1 : index
    %c0_4 = arith.constant 0 : index
    %c0_5 = arith.constant 0 : index
    %10 = vector.load %arg2[%c1, %c0_4, %c0_5] : memref<8x128x128xbf16, #tpu.memory_space<vmem>>, vector<1x128x128xbf16>
    %11 = vector.shape_cast %10 : vector<1x128x128xbf16> to vector<128x128xbf16>
    %c1_6 = arith.constant 1 : index
    %c0_7 = arith.constant 0 : index
    %12 = vector.load %arg3[%c1_6, %c0_7] : memref<9x128xf32, #tpu.memory_space<vmem>>, vector<1x128xf32>
    %13 = arith.truncf %9 : vector<8x128xf32> to vector<8x128xbf16>
    %cst_8 = arith.constant dense<0.000000e+00> : vector<8x128xf32>
    %14 = tpu.matmul %13, %11, %cst_8 {dimension_numbers = #tpu.dot_dimension_numbers<[1], [0], [0], [1], [0, 0, 1, 1], [], []>} : vector<8x128xbf16>, vector<128x128xbf16>, vector<8x128xf32> -> vector<8x128xf32>
    %15 = vector.broadcast %12 : vector<1x128xf32> to vector<8x128xf32>
    %16 = arith.addf %14, %15 : vector<8x128xf32>
    %cst_9 = arith.constant 0.000000e+00 : f32
    %17 = vector.broadcast %cst_9 : f32 to vector<8x128xf32>
    %18 = arith.maximumf %16, %17 : vector<8x128xf32>
    %c2 = arith.constant 2 : index
    %c0_10 = arith.constant 0 : index
    %c0_11 = arith.constant 0 : index
    %19 = vector.load %arg2[%c2, %c0_10, %c0_11] : memref<8x128x128xbf16, #tpu.memory_space<vmem>>, vector<1x128x128xbf16>
    %20 = vector.shape_cast %19 : vector<1x128x128xbf16> to vector<128x128xbf16>
    %c2_12 = arith.constant 2 : index
    %c0_13 = arith.constant 0 : index
    %21 = vector.load %arg3[%c2_12, %c0_13] : memref<9x128xf32, #tpu.memory_space<vmem>>, vector<1x128xf32>
    %22 = arith.truncf %18 : vector<8x128xf32> to vector<8x128xbf16>
    %cst_14 = arith.constant dense<0.000000e+00> : vector<8x128xf32>
    %23 = tpu.matmul %22, %20, %cst_14 {dimension_numbers = #tpu.dot_dimension_numbers<[1], [0], [0], [1], [0, 0, 1, 1], [], []>} : vector<8x128xbf16>, vector<128x128xbf16>, vector<8x128xf32> -> vector<8x128xf32>
    %24 = vector.broadcast %21 : vector<1x128xf32> to vector<8x128xf32>
    %25 = arith.addf %23, %24 : vector<8x128xf32>
    %cst_15 = arith.constant 0.000000e+00 : f32
    %26 = vector.broadcast %cst_15 : f32 to vector<8x128xf32>
    %27 = arith.maximumf %25, %26 : vector<8x128xf32>
    %c3 = arith.constant 3 : index
    %c0_16 = arith.constant 0 : index
    %c0_17 = arith.constant 0 : index
    %28 = vector.load %arg2[%c3, %c0_16, %c0_17] : memref<8x128x128xbf16, #tpu.memory_space<vmem>>, vector<1x128x128xbf16>
    %29 = vector.shape_cast %28 : vector<1x128x128xbf16> to vector<128x128xbf16>
    %c3_18 = arith.constant 3 : index
    %c0_19 = arith.constant 0 : index
    %30 = vector.load %arg3[%c3_18, %c0_19] : memref<9x128xf32, #tpu.memory_space<vmem>>, vector<1x128xf32>
    %31 = arith.truncf %27 : vector<8x128xf32> to vector<8x128xbf16>
    %cst_20 = arith.constant dense<0.000000e+00> : vector<8x128xf32>
    %32 = tpu.matmul %31, %29, %cst_20 {dimension_numbers = #tpu.dot_dimension_numbers<[1], [0], [0], [1], [0, 0, 1, 1], [], []>} : vector<8x128xbf16>, vector<128x128xbf16>, vector<8x128xf32> -> vector<8x128xf32>
    %33 = vector.broadcast %30 : vector<1x128xf32> to vector<8x128xf32>
    %34 = arith.addf %32, %33 : vector<8x128xf32>
    %cst_21 = arith.constant 0.000000e+00 : f32
    %35 = vector.broadcast %cst_21 : f32 to vector<8x128xf32>
    %36 = arith.maximumf %34, %35 : vector<8x128xf32>
    %c4 = arith.constant 4 : index
    %c0_22 = arith.constant 0 : index
    %c0_23 = arith.constant 0 : index
    %37 = vector.load %arg2[%c4, %c0_22, %c0_23] : memref<8x128x128xbf16, #tpu.memory_space<vmem>>, vector<1x128x128xbf16>
    %38 = vector.shape_cast %37 : vector<1x128x128xbf16> to vector<128x128xbf16>
    %c4_24 = arith.constant 4 : index
    %c0_25 = arith.constant 0 : index
    %39 = vector.load %arg3[%c4_24, %c0_25] : memref<9x128xf32, #tpu.memory_space<vmem>>, vector<1x128xf32>
    %40 = arith.truncf %36 : vector<8x128xf32> to vector<8x128xbf16>
    %cst_26 = arith.constant dense<0.000000e+00> : vector<8x128xf32>
    %41 = tpu.matmul %40, %38, %cst_26 {dimension_numbers = #tpu.dot_dimension_numbers<[1], [0], [0], [1], [0, 0, 1, 1], [], []>} : vector<8x128xbf16>, vector<128x128xbf16>, vector<8x128xf32> -> vector<8x128xf32>
    %42 = vector.broadcast %39 : vector<1x128xf32> to vector<8x128xf32>
    %43 = arith.addf %41, %42 : vector<8x128xf32>
    %cst_27 = arith.constant 0.000000e+00 : f32
    %44 = vector.broadcast %cst_27 : f32 to vector<8x128xf32>
    %45 = arith.maximumf %43, %44 : vector<8x128xf32>
    %c5 = arith.constant 5 : index
    %c0_28 = arith.constant 0 : index
    %c0_29 = arith.constant 0 : index
    %46 = vector.load %arg2[%c5, %c0_28, %c0_29] : memref<8x128x128xbf16, #tpu.memory_space<vmem>>, vector<1x128x128xbf16>
    %47 = vector.shape_cast %46 : vector<1x128x128xbf16> to vector<128x128xbf16>
    %c5_30 = arith.constant 5 : index
    %c0_31 = arith.constant 0 : index
    %48 = vector.load %arg3[%c5_30, %c0_31] : memref<9x128xf32, #tpu.memory_space<vmem>>, vector<1x128xf32>
    %49 = arith.truncf %45 : vector<8x128xf32> to vector<8x128xbf16>
    %cst_32 = arith.constant dense<0.000000e+00> : vector<8x128xf32>
    %50 = tpu.matmul %49, %47, %cst_32 {dimension_numbers = #tpu.dot_dimension_numbers<[1], [0], [0], [1], [0, 0, 1, 1], [], []>} : vector<8x128xbf16>, vector<128x128xbf16>, vector<8x128xf32> -> vector<8x128xf32>
    %51 = vector.broadcast %48 : vector<1x128xf32> to vector<8x128xf32>
    %52 = arith.addf %50, %51 : vector<8x128xf32>
    %cst_33 = arith.constant 0.000000e+00 : f32
    %53 = vector.broadcast %cst_33 : f32 to vector<8x128xf32>
    %54 = arith.maximumf %52, %53 : vector<8x128xf32>
    %c6 = arith.constant 6 : index
    %c0_34 = arith.constant 0 : index
    %c0_35 = arith.constant 0 : index
    %55 = vector.load %arg2[%c6, %c0_34, %c0_35] : memref<8x128x128xbf16, #tpu.memory_space<vmem>>, vector<1x128x128xbf16>
    %56 = vector.shape_cast %55 : vector<1x128x128xbf16> to vector<128x128xbf16>
    %c6_36 = arith.constant 6 : index
    %c0_37 = arith.constant 0 : index
    %57 = vector.load %arg3[%c6_36, %c0_37] : memref<9x128xf32, #tpu.memory_space<vmem>>, vector<1x128xf32>
    %58 = arith.truncf %54 : vector<8x128xf32> to vector<8x128xbf16>
    %cst_38 = arith.constant dense<0.000000e+00> : vector<8x128xf32>
    %59 = tpu.matmul %58, %56, %cst_38 {dimension_numbers = #tpu.dot_dimension_numbers<[1], [0], [0], [1], [0, 0, 1, 1], [], []>} : vector<8x128xbf16>, vector<128x128xbf16>, vector<8x128xf32> -> vector<8x128xf32>
    %60 = vector.broadcast %57 : vector<1x128xf32> to vector<8x128xf32>
    %61 = arith.addf %59, %60 : vector<8x128xf32>
    %cst_39 = arith.constant 0.000000e+00 : f32
    %62 = vector.broadcast %cst_39 : f32 to vector<8x128xf32>
    %63 = arith.maximumf %61, %62 : vector<8x128xf32>
    %c7 = arith.constant 7 : index
    %c0_40 = arith.constant 0 : index
    %c0_41 = arith.constant 0 : index
    %64 = vector.load %arg2[%c7, %c0_40, %c0_41] : memref<8x128x128xbf16, #tpu.memory_space<vmem>>, vector<1x128x128xbf16>
    %65 = vector.shape_cast %64 : vector<1x128x128xbf16> to vector<128x128xbf16>
    %c7_42 = arith.constant 7 : index
    %c0_43 = arith.constant 0 : index
    %66 = vector.load %arg3[%c7_42, %c0_43] : memref<9x128xf32, #tpu.memory_space<vmem>>, vector<1x128xf32>
    %67 = arith.truncf %63 : vector<8x128xf32> to vector<8x128xbf16>
    %cst_44 = arith.constant dense<0.000000e+00> : vector<8x128xf32>
    %68 = tpu.matmul %67, %65, %cst_44 {dimension_numbers = #tpu.dot_dimension_numbers<[1], [0], [0], [1], [0, 0, 1, 1], [], []>} : vector<8x128xbf16>, vector<128x128xbf16>, vector<8x128xf32> -> vector<8x128xf32>
    %69 = vector.broadcast %66 : vector<1x128xf32> to vector<8x128xf32>
    %70 = arith.addf %68, %69 : vector<8x128xf32>
    %71 = arith.negf %70 : vector<8x128xf32>
    %72 = math.exp %71 : vector<8x128xf32>
    %cst_45 = arith.constant 1.000000e+00 : f32
    %73 = vector.broadcast %cst_45 : f32 to vector<8x128xf32>
    %74 = arith.addf %73, %72 : vector<8x128xf32>
    %75 = arith.divf %73, %74 : vector<8x128xf32>
    %c0_46 = arith.constant 0 : index
    %c0_47 = arith.constant 0 : index
    %76 = vector.load %arg4[%c0_46, %c0_47] : memref<8x128xf32, #tpu.memory_space<vmem>>, vector<8x128xf32>
    tpu.vector_store %arg4[%c0_46, %c0_47], %75 {strides = array<i32>} : memref<8x128xf32, #tpu.memory_space<vmem>>, vector<8x128xf32>,
    return
  }
  func.func @transform_0(%arg0: i32) -> (i32, i32) {
    %c0_i32 = arith.constant 0 : i32
    %c0_i32_0 = arith.constant 0 : i32
    return %arg0, %c0_i32 : i32, i32
  }
  func.func @transform_1(%arg0: i32) -> (i32, i32, i32) {
    %c0_i32 = arith.constant 0 : i32
    %c0_i32_0 = arith.constant 0 : i32
    %c0_i32_1 = arith.constant 0 : i32
    %c0_i32_2 = arith.constant 0 : i32
    return %c0_i32, %c0_i32_0, %c0_i32_1 : i32, i32, i32
  }
  func.func @transform_2(%arg0: i32) -> (i32, i32) {
    %c0_i32 = arith.constant 0 : i32
    %c0_i32_0 = arith.constant 0 : i32
    %c0_i32_1 = arith.constant 0 : i32
    return %c0_i32, %c0_i32_0 : i32, i32
  }
  func.func @transform_3(%arg0: i32) -> (i32, i32) {
    %c0_i32 = arith.constant 0 : i32
    %c0_i32_0 = arith.constant 0 : i32
    return %arg0, %c0_i32 : i32, i32
  }
}

</mosaic_0001>

<llo_original>
// kernel: tpu_custom_call.1
$region0: #{tpu_custom_call.1}
  #allocation0 [shape = 'u32[]', space=smem, size = 0x4, offset = 0x4, fixed_abs, tag = 'smem constant byte address 0x4 - core index']
  #allocation1 [shape = 'u32[72,128]{1,0:T(1,128)}', space=vmem, size = 0x9000, scoped, tag = 'internal scratch']
  %s0 = inlined_call_operand.vmem [shape: f32[8,1], index: 0, kind: input, shape index: {}]
  %s1 = inlined_call_operand.hbm [shape: bf16[8,128,128], index: 1, kind: input, shape index: {}]
  %s2 = inlined_call_operand.hbm [shape: f32[9,128], index: 2, kind: input, shape index: {}]
  %s3 = inlined_call_operand.hbm [shape: f32[8,128], index: 3, kind: output, shape index: {}]
  %s4 = sld [smem:[#allocation0]]
  $region30: #{tpu_custom_call.1} parent=0
    _
  %s6 = ssub.s32 1, %s4
  %s7 = scalar_select 0, %s6, %s4
  $region1: #{tpu_custom_call.1} parent=0
    #allocation2 [shape = 'u8[262144]{0}', space=vmem, size = 0x40000, scoped, tag = 'input window, operand 1, single buffered']
    #allocation3 [shape = 's32[1]{0}', space=sflag, size = 0x4, scoped, tag = 'scoped memory for tpu_custom_call.1']
    #allocation4 [shape = 's32[1]{0}', space=sflag, size = 0x4, scoped, tag = 'scoped memory for tpu_custom_call.1']
    #allocation5 [shape = 'u8[8192]{0}', space=vmem, size = 0x2000, scoped, tag = 'input window, operand 2, single buffered']
    #allocation6 [shape = 's32[1]{0}', space=sflag, size = 0x4, scoped, tag = 'scoped memory for tpu_custom_call.1']
    #allocation7 [shape = 'u8[4096]{0}', space=vmem, size = 0x1000, scoped, tag = 'output window, operand 0, single buffered']
    %8 = vsyncpa [#allocation3], 0
    %9 = vsyncpa [#allocation6], 0
    %10 = vsyncpa [#allocation4], 0
    // Predicated region
    $region2: #{tpu_custom_call.1} parent=1 // pred_check
      _
    $region3: #{tpu_custom_call.1} parent=1 // pred_check_branch
      %12 = sbr.rel (0) target = $region5
    $region4: #{tpu_custom_call.1} parent=1 // pred_region
      _
    $region5: #{tpu_custom_call.1} parent=1 // pred_fallthru
      _
    // Predicated region
    $region6: #{tpu_custom_call.1} parent=1 // pred_check
      _
    $region7: #{tpu_custom_call.1} parent=1 // pred_check_branch
      %14 = sbr.rel (0) target = $region9
    $region8: #{tpu_custom_call.1} parent=1 // pred_region
      %16 = vsyncadd [#allocation3], 0
      %s17 = sshll.u32 %s1, 4
      %s18 = int_to_ptr.hbm [resolvable:$true] %s17
      %s19 = sshll.u32 [#allocation2], 4
      %s20 = int_to_ptr.vmem [resolvable:$true] %s19
      %25 = dma.hbm_to_vmem [thread:$0]  %s18, 8192, %s20, [#allocation3], 64, 64, 4
    $region9: #{tpu_custom_call.1} parent=1 // pred_fallthru
      _
    // Predicated region
    $region10: #{tpu_custom_call.1} parent=1 // pred_check
      _
    $region11: #{tpu_custom_call.1} parent=1 // pred_check_branch
      %27 = sbr.rel (0) target = $region13
    $region12: #{tpu_custom_call.1} parent=1 // pred_region
      %29 = vsyncadd [#allocation6], 0
      %s30 = sshll.u32 %s2, 4
      %s31 = int_to_ptr.hbm [resolvable:$true] %s30
      %s32 = sshll.u32 [#allocation5], 4
      %s33 = int_to_ptr.vmem [resolvable:$true] %s32
      %38 = dma.hbm_to_vmem [thread:$0]  %s31, 256, %s33, [#allocation6], 128, 128, 8
    $region13: #{tpu_custom_call.1} parent=1 // pred_fallthru
      _
    // Predicated region
    $region14: #{tpu_custom_call.1} parent=1 // pred_check
      _
    $region15: #{tpu_custom_call.1} parent=1 // pred_check_branch
      %40 = sbr.rel (0) target = $region17
    $region16: #{tpu_custom_call.1} parent=1 // pred_region
      %42 = dma.done [#allocation3], 8192
    $region17: #{tpu_custom_call.1} parent=1 // pred_fallthru
      _
    // Predicated region
    $region18: #{tpu_custom_call.1} parent=1 // pred_check
      _
    $region19: #{tpu_custom_call.1} parent=1 // pred_check_branch
      %44 = sbr.rel (0) target = $region21
    $region20: #{tpu_custom_call.1} parent=1 // pred_region
      %46 = dma.done [#allocation6], 256
    $region21: #{tpu_custom_call.1} parent=1 // pred_fallthru
      _
    %v47 = vld [vmem:[%s0] sm:$0xff]
    %v48 = vld [vmem:[#allocation5 + $0x8] sm:$0x1]
    %50 = vset.pattern.permute.xlu0 0
    %51 = vperm.xlu0 %50, %v47
    %v52 = vpop.permute.xlu0 %51
    %v54 = vperm.slane %v48, 0
    %v55 = vmul.f32 %v52, %v54
    %v56 = vld [vmem:[#allocation5] sm:$0x1]
    %v57 = vperm.slane %v56, 0
    %v58 = vadd.f32 %v55, %v57
    %v59 = vmax.f32 %v58, 0.0
    %s60 = scalar_lea.vmem [#allocation2], 64
    %v61 = vld [vmem:[%s60] sm:$0xf]
    %v62 = vld [vmem:[%s60 + $0x4] sm:$0xf]
    %v63 = vld [vmem:[%s60 + $0x8] sm:$0xf]
    %v64 = vld [vmem:[%s60 + $0xc] sm:$0xf]
    %v65 = vld [vmem:[%s60 + $0x10] sm:$0xf]
    %v66 = vld [vmem:[%s60 + $0x14] sm:$0xf]
    %v67 = vld [vmem:[%s60 + $0x18] sm:$0xf]
    %v68 = vld [vmem:[%s60 + $0x1c] sm:$0xf]
    %v69 = vld [vmem:[%s60 + $0x20] sm:$0xf]
    %v70 = vld [vmem:[%s60 + $0x24] sm:$0xf]
    %v71 = vld [vmem:[%s60 + $0x28] sm:$0xf]
    %v72 = vld [vmem:[%s60 + $0x2c] sm:$0xf]
    %v73 = vld [vmem:[%s60 + $0x30] sm:$0xf]
    %v74 = vld [vmem:[%s60 + $0x34] sm:$0xf]
    %v75 = vld [vmem:[%s60 + $0x38] sm:$0xf]
    %v76 = vld [vmem:[%s60 + $0x3c] sm:$0xf]
    %v77 = vld [vmem:[#allocation5 + $0x1] sm:$0x1]
    %v78 = vpack.c.bf16 %v59, %v59
    %v79 = vperm.slane %v77, 0
    %v96 = vunpack.c.l.b16 %v61
    %v97 = vunpack.c.l.b16 %v62
    %v98 = vunpack.c.l.b16 %v63
    %v99 = vunpack.c.l.b16 %v64
    %v100 = vunpack.c.l.b16 %v65
    %v101 = vunpack.c.l.b16 %v66
    %v102 = vunpack.c.l.b16 %v67
    %v103 = vunpack.c.l.b16 %v68
    %v104 = vunpack.c.l.b16 %v69
    %v105 = vunpack.c.l.b16 %v70
    %v106 = vunpack.c.l.b16 %v71
    %v107 = vunpack.c.l.b16 %v72
    %v108 = vunpack.c.l.b16 %v73
    %v109 = vunpack.c.l.b16 %v74
    %v110 = vunpack.c.l.b16 %v75
    %v111 = vunpack.c.l.b16 %v76
    %v112 = vpack.c.b16 %v97, %v96
    %v113 = vpack.c.b16 %v99, %v98
    %v114 = vpack.c.b16 %v101, %v100
    %v115 = vpack.c.b16 %v103, %v102
    %v116 = vpack.c.b16 %v105, %v104
    %v117 = vpack.c.b16 %v107, %v106
    %v118 = vpack.c.b16 %v109, %v108
    %v119 = vpack.c.b16 %v111, %v110
    %128 = vmatpush.bf16.msra.mxu0 %v119
    %129 = vmatpush.bf16.msra.mxu0 %v118
    %130 = vmatpush.bf16.msra.mxu0 %v117
    %131 = vmatpush.bf16.msra.mxu0 %v116
    %132 = vmatpush.bf16.msra.mxu0 %v115
    %133 = vmatpush.bf16.msra.mxu0 %v114
    %134 = vmatpush.bf16.msra.mxu0 %v113
    %135 = vmatpush.bf16.msra.mxu0 %v112
    %136 = vmatmul.bf16.gmra.mxu0 %v78
    %v137 = vpop.f32.mrf.mxu0
    %v138 = vadd.f32 %v79, %v137
    %v139 = vpop.f32.mrf.mxu0
    %140 = vdwg.mxu0
    %v141 = vmax.f32 %v138, 0.0
    %s142 = scalar_lea.vmem [#allocation2], 128
    %v143 = vld [vmem:[%s142] sm:$0xf]
    %v144 = vld [vmem:[%s142 + $0x4] sm:$0xf]
    %v145 = vld [vmem:[%s142 + $0x8] sm:$0xf]
    %v146 = vld [vmem:[%s142 + $0xc] sm:$0xf]
    %v147 = vld [vmem:[%s142 + $0x10] sm:$0xf]
    %v148 = vld [vmem:[%s142 + $0x14] sm:$0xf]
    %v149 = vld [vmem:[%s142 + $0x18] sm:$0xf]
    %v150 = vld [vmem:[%s142 + $0x1c] sm:$0xf]
    %v151 = vld [vmem:[%s142 + $0x20] sm:$0xf]
    %v152 = vld [vmem:[%s142 + $0x24] sm:$0xf]
    %v153 = vld [vmem:[%s142 + $0x28] sm:$0xf]
    %v154 = vld [vmem:[%s142 + $0x2c] sm:$0xf]
    %v155 = vld [vmem:[%s142 + $0x30] sm:$0xf]
    %v156 = vld [vmem:[%s142 + $0x34] sm:$0xf]
    %v157 = vld [vmem:[%s142 + $0x38] sm:$0xf]
    %v158 = vld [vmem:[%s142 + $0x3c] sm:$0xf]
    %v159 = vld [vmem:[#allocation5 + $0x2] sm:$0x1]
    %v160 = vpack.c.bf16 %v141, %v141
    %v161 = vperm.slane %v159, 0
    %v178 = vunpack.c.l.b16 %v143
    %v179 = vunpack.c.l.b16 %v144
    %v180 = vunpack.c.l.b16 %v145
    %v181 = vunpack.c.l.b16 %v146
    %v182 = vunpack.c.l.b16 %v147
    %v183 = vunpack.c.l.b16 %v148
    %v184 = vunpack.c.l.b16 %v149
    %v185 = vunpack.c.l.b16 %v150
    %v186 = vunpack.c.l.b16 %v151
    %v187 = vunpack.c.l.b16 %v152
    %v188 = vunpack.c.l.b16 %v153
    %v189 = vunpack.c.l.b16 %v154
    %v190 = vunpack.c.l.b16 %v155
    %v191 = vunpack.c.l.b16 %v156
    %v192 = vunpack.c.l.b16 %v157
    %v193 = vunpack.c.l.b16 %v158
    %v194 = vpack.c.b16 %v179, %v178
    %v195 = vpack.c.b16 %v181, %v180
    %v196 = vpack.c.b16 %v183, %v182
    %v197 = vpack.c.b16 %v185, %v184
    %v198 = vpack.c.b16 %v187, %v186
    %v199 = vpack.c.b16 %v189, %v188
    %v200 = vpack.c.b16 %v191, %v190
    %v201 = vpack.c.b16 %v193, %v192
    %210 = vmatpush.bf16.msra.mxu0 %v201
    %211 = vmatpush.bf16.msra.mxu0 %v200
    %212 = vmatpush.bf16.msra.mxu0 %v199
    %213 = vmatpush.bf16.msra.mxu0 %v198
    %214 = vmatpush.bf16.msra.mxu0 %v197
    %215 = vmatpush.bf16.msra.mxu0 %v196
    %216 = vmatpush.bf16.msra.mxu0 %v195
    %217 = vmatpush.bf16.msra.mxu0 %v194
    %218 = vmatmul.bf16.gmra.mxu0 %v160
    %v219 = vpop.f32.mrf.mxu0
    %v220 = vadd.f32 %v161, %v219
    %v221 = vpop.f32.mrf.mxu0
    %222 = vdwg.mxu0
    %v223 = vmax.f32 %v220, 0.0
    %s224 = scalar_lea.vmem [#allocation2], 192
    %v225 = vld [vmem:[%s224] sm:$0xf]
    %v226 = vld [vmem:[%s224 + $0x4] sm:$0xf]
    %v227 = vld [vmem:[%s224 + $0x8] sm:$0xf]
    %v228 = vld [vmem:[%s224 + $0xc] sm:$0xf]
    %v229 = vld [vmem:[%s224 + $0x10] sm:$0xf]
    %v230 = vld [vmem:[%s224 + $0x14] sm:$0xf]
    %v231 = vld [vmem:[%s224 + $0x18] sm:$0xf]
    %v232 = vld [vmem:[%s224 + $0x1c] sm:$0xf]
    %v233 = vld [vmem:[%s224 + $0x20] sm:$0xf]
    %v234 = vld [vmem:[%s224 + $0x24] sm:$0xf]
    %v235 = vld [vmem:[%s224 + $0x28] sm:$0xf]
    %v236 = vld [vmem:[%s224 + $0x2c] sm:$0xf]
    %v237 = vld [vmem:[%s224 + $0x30] sm:$0xf]
    %v238 = vld [vmem:[%s224 + $0x34] sm:$0xf]
    %v239 = vld [vmem:[%s224 + $0x38] sm:$0xf]
    %v240 = vld [vmem:[%s224 + $0x3c] sm:$0xf]
    %v241 = vld [vmem:[#allocation5 + $0x3] sm:$0x1]
    %v242 = vpack.c.bf16 %v223, %v223
    %v243 = vperm.slane %v241, 0
    %v260 = vunpack.c.l.b16 %v225
    %v261 = vunpack.c.l.b16 %v226
    %v262 = vunpack.c.l.b16 %v227
    %v263 = vunpack.c.l.b16 %v228
    %v264 = vunpack.c.l.b16 %v229
    %v265 = vunpack.c.l.b16 %v230
    %v266 = vunpack.c.l.b16 %v231
    %v267 = vunpack.c.l.b16 %v232
    %v268 = vunpack.c.l.b16 %v233
    %v269 = vunpack.c.l.b16 %v234
    %v270 = vunpack.c.l.b16 %v235
    %v271 = vunpack.c.l.b16 %v236
    %v272 = vunpack.c.l.b16 %v237
    %v273 = vunpack.c.l.b16 %v238
    %v274 = vunpack.c.l.b16 %v239
    %v275 = vunpack.c.l.b16 %v240
    %v276 = vpack.c.b16 %v261, %v260
    %v277 = vpack.c.b16 %v263, %v262
    %v278 = vpack.c.b16 %v265, %v264
    %v279 = vpack.c.b16 %v267, %v266
    %v280 = vpack.c.b16 %v269, %v268
    %v281 = vpack.c.b16 %v271, %v270
    %v282 = vpack.c.b16 %v273, %v272
    %v283 = vpack.c.b16 %v275, %v274
    %292 = vmatpush.bf16.msra.mxu0 %v283
    %293 = vmatpush.bf16.msra.mxu0 %v282
    %294 = vmatpush.bf16.msra.mxu0 %v281
    %295 = vmatpush.bf16.msra.mxu0 %v280
    %296 = vmatpush.bf16.msra.mxu0 %v279
    %297 = vmatpush.bf16.msra.mxu0 %v278
    %298 = vmatpush.bf16.msra.mxu0 %v277
    %299 = vmatpush.bf16.msra.mxu0 %v276
    %300 = vmatmul.bf16.gmra.mxu0 %v242
    %v301 = vpop.f32.mrf.mxu0
    %v302 = vadd.f32 %v243, %v301
    %v303 = vpop.f32.mrf.mxu0
    %304 = vdwg.mxu0
    %v305 = vmax.f32 %v302, 0.0
    %s306 = scalar_lea.vmem [#allocation2], 256
    %v307 = vld [vmem:[%s306] sm:$0xf]
    %v308 = vld [vmem:[%s306 + $0x4] sm:$0xf]
    %v309 = vld [vmem:[%s306 + $0x8] sm:$0xf]
    %v310 = vld [vmem:[%s306 + $0xc] sm:$0xf]
    %v311 = vld [vmem:[%s306 + $0x10] sm:$0xf]
    %v312 = vld [vmem:[%s306 + $0x14] sm:$0xf]
    %v313 = vld [vmem:[%s306 + $0x18] sm:$0xf]
    %v314 = vld [vmem:[%s306 + $0x1c] sm:$0xf]
    %v315 = vld [vmem:[%s306 + $0x20] sm:$0xf]
    %v316 = vld [vmem:[%s306 + $0x24] sm:$0xf]
    %v317 = vld [vmem:[%s306 + $0x28] sm:$0xf]
    %v318 = vld [vmem:[%s306 + $0x2c] sm:$0xf]
    %v319 = vld [vmem:[%s306 + $0x30] sm:$0xf]
    %v320 = vld [vmem:[%s306 + $0x34] sm:$0xf]
    %v321 = vld [vmem:[%s306 + $0x38] sm:$0xf]
    %v322 = vld [vmem:[%s306 + $0x3c] sm:$0xf]
    %v323 = vld [vmem:[#allocation5 + $0x4] sm:$0x1]
    %v324 = vpack.c.bf16 %v305, %v305
    %v325 = vperm.slane %v323, 0
    %v342 = vunpack.c.l.b16 %v307
    %v343 = vunpack.c.l.b16 %v308
    %v344 = vunpack.c.l.b16 %v309
    %v345 = vunpack.c.l.b16 %v310
    %v346 = vunpack.c.l.b16 %v311
    %v347 = vunpack.c.l.b16 %v312
    %v348 = vunpack.c.l.b16 %v313
    %v349 = vunpack.c.l.b16 %v314
    %v350 = vunpack.c.l.b16 %v315
    %v351 = vunpack.c.l.b16 %v316
    %v352 = vunpack.c.l.b16 %v317
    %v353 = vunpack.c.l.b16 %v318
    %v354 = vunpack.c.l.b16 %v319
    %v355 = vunpack.c.l.b16 %v320
    %v356 = vunpack.c.l.b16 %v321
    %v357 = vunpack.c.l.b16 %v322
    %v358 = vpack.c.b16 %v343, %v342
    %v359 = vpack.c.b16 %v345, %v344
    %v360 = vpack.c.b16 %v347, %v346
    %v361 = vpack.c.b16 %v349, %v348
    %v362 = vpack.c.b16 %v351, %v350
    %v363 = vpack.c.b16 %v353, %v352
    %v364 = vpack.c.b16 %v355, %v354
    %v365 = vpack.c.b16 %v357, %v356
    %374 = vmatpush.bf16.msra.mxu0 %v365
    %375 = vmatpush.bf16.msra.mxu0 %v364
    %376 = vmatpush.bf16.msra.mxu0 %v363
    %377 = vmatpush.bf16.msra.mxu0 %v362
    %378 = vmatpush.bf16.msra.mxu0 %v361
    %379 = vmatpush.bf16.msra.mxu0 %v360
    %380 = vmatpush.bf16.msra.mxu0 %v359
    %381 = vmatpush.bf16.msra.mxu0 %v358
    %382 = vmatmul.bf16.gmra.mxu0 %v324
    %v383 = vpop.f32.mrf.mxu0
    %v384 = vadd.f32 %v325, %v383
    %v385 = vpop.f32.mrf.mxu0
    %386 = vdwg.mxu0
    %v387 = vmax.f32 %v384, 0.0
    %s388 = scalar_lea.vmem [#allocation2], 320
    %v389 = vld [vmem:[%s388] sm:$0xf]
    %v390 = vld [vmem:[%s388 + $0x4] sm:$0xf]
    %v391 = vld [vmem:[%s388 + $0x8] sm:$0xf]
    %v392 = vld [vmem:[%s388 + $0xc] sm:$0xf]
    %v393 = vld [vmem:[%s388 + $0x10] sm:$0xf]
    %v394 = vld [vmem:[%s388 + $0x14] sm:$0xf]
    %v395 = vld [vmem:[%s388 + $0x18] sm:$0xf]
    %v396 = vld [vmem:[%s388 + $0x1c] sm:$0xf]
    %v397 = vld [vmem:[%s388 + $0x20] sm:$0xf]
    %v398 = vld [vmem:[%s388 + $0x24] sm:$0xf]
    %v399 = vld [vmem:[%s388 + $0x28] sm:$0xf]
    %v400 = vld [vmem:[%s388 + $0x2c] sm:$0xf]
    %v401 = vld [vmem:[%s388 + $0x30] sm:$0xf]
    %v402 = vld [vmem:[%s388 + $0x34] sm:$0xf]
    %v403 = vld [vmem:[%s388 + $0x38] sm:$0xf]
    %v404 = vld [vmem:[%s388 + $0x3c] sm:$0xf]
    %v405 = vld [vmem:[#allocation5 + $0x5] sm:$0x1]
    %v406 = vpack.c.bf16 %v387, %v387
    %v407 = vperm.slane %v405, 0
    %v424 = vunpack.c.l.b16 %v389
    %v425 = vunpack.c.l.b16 %v390
    %v426 = vunpack.c.l.b16 %v391
    %v427 = vunpack.c.l.b16 %v392
    %v428 = vunpack.c.l.b16 %v393
    %v429 = vunpack.c.l.b16 %v394
    %v430 = vunpack.c.l.b16 %v395
    %v431 = vunpack.c.l.b16 %v396
    %v432 = vunpack.c.l.b16 %v397
    %v433 = vunpack.c.l.b16 %v398
    %v434 = vunpack.c.l.b16 %v399
    %v435 = vunpack.c.l.b16 %v400
    %v436 = vunpack.c.l.b16 %v401
    %v437 = vunpack.c.l.b16 %v402
    %v438 = vunpack.c.l.b16 %v403
    %v439 = vunpack.c.l.b16 %v404
    %v440 = vpack.c.b16 %v425, %v424
    %v441 = vpack.c.b16 %v427, %v426
    %v442 = vpack.c.b16 %v429, %v428
    %v443 = vpack.c.b16 %v431, %v430
    %v444 = vpack.c.b16 %v433, %v432
    %v445 = vpack.c.b16 %v435, %v434
    %v446 = vpack.c.b16 %v437, %v436
    %v447 = vpack.c.b16 %v439, %v438
    %456 = vmatpush.bf16.msra.mxu0 %v447
    %457 = vmatpush.bf16.msra.mxu0 %v446
    %458 = vmatpush.bf16.msra.mxu0 %v445
    %459 = vmatpush.bf16.msra.mxu0 %v444
    %460 = vmatpush.bf16.msra.mxu0 %v443
    %461 = vmatpush.bf16.msra.mxu0 %v442
    %462 = vmatpush.bf16.msra.mxu0 %v441
    %463 = vmatpush.bf16.msra.mxu0 %v440
    %464 = vmatmul.bf16.gmra.mxu0 %v406
    %v465 = vpop.f32.mrf.mxu0
    %v466 = vadd.f32 %v407, %v465
    %v467 = vpop.f32.mrf.mxu0
    %468 = vdwg.mxu0
    %v469 = vmax.f32 %v466, 0.0
    %s470 = scalar_lea.vmem [#allocation2], 384
    %v471 = vld [vmem:[%s470] sm:$0xf]
    %v472 = vld [vmem:[%s470 + $0x4] sm:$0xf]
    %v473 = vld [vmem:[%s470 + $0x8] sm:$0xf]
    %v474 = vld [vmem:[%s470 + $0xc] sm:$0xf]
    %v475 = vld [vmem:[%s470 + $0x10] sm:$0xf]
    %v476 = vld [vmem:[%s470 + $0x14] sm:$0xf]
    %v477 = vld [vmem:[%s470 + $0x18] sm:$0xf]
    %v478 = vld [vmem:[%s470 + $0x1c] sm:$0xf]
    %v479 = vld [vmem:[%s470 + $0x20] sm:$0xf]
    %v480 = vld [vmem:[%s470 + $0x24] sm:$0xf]
    %v481 = vld [vmem:[%s470 + $0x28] sm:$0xf]
    %v482 = vld [vmem:[%s470 + $0x2c] sm:$0xf]
    %v483 = vld [vmem:[%s470 + $0x30] sm:$0xf]
    %v484 = vld [vmem:[%s470 + $0x34] sm:$0xf]
    %v485 = vld [vmem:[%s470 + $0x38] sm:$0xf]
    %v486 = vld [vmem:[%s470 + $0x3c] sm:$0xf]
    %v487 = vld [vmem:[#allocation5 + $0x6] sm:$0x1]
    %v488 = vpack.c.bf16 %v469, %v469
    %v489 = vperm.slane %v487, 0
    %v506 = vunpack.c.l.b16 %v471
    %v507 = vunpack.c.l.b16 %v472
    %v508 = vunpack.c.l.b16 %v473
    %v509 = vunpack.c.l.b16 %v474
    %v510 = vunpack.c.l.b16 %v475
    %v511 = vunpack.c.l.b16 %v476
    %v512 = vunpack.c.l.b16 %v477
    %v513 = vunpack.c.l.b16 %v478
    %v514 = vunpack.c.l.b16 %v479
    %v515 = vunpack.c.l.b16 %v480
    %v516 = vunpack.c.l.b16 %v481
    %v517 = vunpack.c.l.b16 %v482
    %v518 = vunpack.c.l.b16 %v483
    %v519 = vunpack.c.l.b16 %v484
    %v520 = vunpack.c.l.b16 %v485
    %v521 = vunpack.c.l.b16 %v486
    %v522 = vpack.c.b16 %v507, %v506
    %v523 = vpack.c.b16 %v509, %v508
    %v524 = vpack.c.b16 %v511, %v510
    %v525 = vpack.c.b16 %v513, %v512
    %v526 = vpack.c.b16 %v515, %v514
    %v527 = vpack.c.b16 %v517, %v516
    %v528 = vpack.c.b16 %v519, %v518
    %v529 = vpack.c.b16 %v521, %v520
    %538 = vmatpush.bf16.msra.mxu0 %v529
    %539 = vmatpush.bf16.msra.mxu0 %v528
    %540 = vmatpush.bf16.msra.mxu0 %v527
    %541 = vmatpush.bf16.msra.mxu0 %v526
    %542 = vmatpush.bf16.msra.mxu0 %v525
    %543 = vmatpush.bf16.msra.mxu0 %v524
    %544 = vmatpush.bf16.msra.mxu0 %v523
    %545 = vmatpush.bf16.msra.mxu0 %v522
    %546 = vmatmul.bf16.gmra.mxu0 %v488
    %v547 = vpop.f32.mrf.mxu0
    %v548 = vadd.f32 %v489, %v547
    %v549 = vpop.f32.mrf.mxu0
    %550 = vdwg.mxu0
    %v551 = vmax.f32 %v548, 0.0
    %s552 = scalar_lea.vmem [#allocation2], 448
    %v553 = vld [vmem:[%s552] sm:$0xf]
    %v554 = vld [vmem:[%s552 + $0x4] sm:$0xf]
    %v555 = vld [vmem:[%s552 + $0x8] sm:$0xf]
    %v556 = vld [vmem:[%s552 + $0xc] sm:$0xf]
    %v557 = vld [vmem:[%s552 + $0x10] sm:$0xf]
    %v558 = vld [vmem:[%s552 + $0x14] sm:$0xf]
    %v559 = vld [vmem:[%s552 + $0x18] sm:$0xf]
    %v560 = vld [vmem:[%s552 + $0x1c] sm:$0xf]
    %v561 = vld [vmem:[%s552 + $0x20] sm:$0xf]
    %v562 = vld [vmem:[%s552 + $0x24] sm:$0xf]
    %v563 = vld [vmem:[%s552 + $0x28] sm:$0xf]
    %v564 = vld [vmem:[%s552 + $0x2c] sm:$0xf]
    %v565 = vld [vmem:[%s552 + $0x30] sm:$0xf]
    %v566 = vld [vmem:[%s552 + $0x34] sm:$0xf]
    %v567 = vld [vmem:[%s552 + $0x38] sm:$0xf]
    %v568 = vld [vmem:[%s552 + $0x3c] sm:$0xf]
    %v569 = vld [vmem:[#allocation5 + $0x7] sm:$0x1]
    %v570 = vpack.c.bf16 %v551, %v551
    %v571 = vperm.slane %v569, 0
    %v588 = vunpack.c.l.b16 %v553
    %v589 = vunpack.c.l.b16 %v554
    %v590 = vunpack.c.l.b16 %v555
    %v591 = vunpack.c.l.b16 %v556
    %v592 = vunpack.c.l.b16 %v557
    %v593 = vunpack.c.l.b16 %v558
    %v594 = vunpack.c.l.b16 %v559
    %v595 = vunpack.c.l.b16 %v560
    %v596 = vunpack.c.l.b16 %v561
    %v597 = vunpack.c.l.b16 %v562
    %v598 = vunpack.c.l.b16 %v563
    %v599 = vunpack.c.l.b16 %v564
    %v600 = vunpack.c.l.b16 %v565
    %v601 = vunpack.c.l.b16 %v566
    %v602 = vunpack.c.l.b16 %v567
    %v603 = vunpack.c.l.b16 %v568
    %v604 = vpack.c.b16 %v589, %v588
    %v605 = vpack.c.b16 %v591, %v590
    %v606 = vpack.c.b16 %v593, %v592
    %v607 = vpack.c.b16 %v595, %v594
    %v608 = vpack.c.b16 %v597, %v596
    %v609 = vpack.c.b16 %v599, %v598
    %v610 = vpack.c.b16 %v601, %v600
    %v611 = vpack.c.b16 %v603, %v602
    %620 = vmatpush.bf16.msra.mxu0 %v611
    %621 = vmatpush.bf16.msra.mxu0 %v610
    %622 = vmatpush.bf16.msra.mxu0 %v609
    %623 = vmatpush.bf16.msra.mxu0 %v608
    %624 = vmatpush.bf16.msra.mxu0 %v607
    %625 = vmatpush.bf16.msra.mxu0 %v606
    %626 = vmatpush.bf16.msra.mxu0 %v605
    %627 = vmatpush.bf16.msra.mxu0 %v604
    %628 = vmatmul.bf16.gmra.mxu0 %v570
    %v629 = vpop.f32.mrf.mxu0
    %v630 = vadd.f32 %v571, %v629
    %v631 = vpop.f32.mrf.mxu0
    %632 = vdwg.mxu0
    %v633 = vxor.u32 %v630, 2147483648
    %v634 = vmul.f32 %v633, 1.442695
    %v635 = vpow.pop %v634
    %v636 = vadd.f32 %v635, 1.0
    %v637 = vrcp.pop %v636
    %v638 = vmul.f32 %v636, %v637
    %v639 = vsub.f32 1.0, %v638
    %v640 = vmul.f32 %v637, %v639
    %v641 = vadd.f32 %v637, %v640
    %vm642 = vweird.f32 %v636
    %vm643 = vweird.f32 %v637
    %vm644 = vmor %vm642, %vm643
    %v645 = vsel %vm644, %v637, %v641
    %v646 = vand.u32 2147483647, %v636
    %vm647 = vcmp.eq.f32.partialorder %v646, 8.507059e+37
    %v648 = vand.u32 %v636, 2147483648
    %v649 = vor.u32 1.1754944e-38, %v648
    %v650 = vsel %vm647, %v649, %v645
    %v651 = vmul.f32 1.0, %v650
    %652 = vst [vmem:[#allocation7] sm:$0xff] %v651
    // Predicated region
    $region22: #{tpu_custom_call.1} parent=1 // pred_check
      _
    $region23: #{tpu_custom_call.1} parent=1 // pred_check_branch
      %654 = sbr.rel (0) target = $region25
    $region24: #{tpu_custom_call.1} parent=1 // pred_region
      %656 = vsyncadd [#allocation4], 0
      %s658 = sshll.u32 [#allocation7], 4
      %s659 = int_to_ptr.vmem [resolvable:$true] %s658
      %s660 = sshll.u32 %s3, 4
      %s661 = int_to_ptr.hbm [resolvable:$true] %s660
      %663 = dma.vmem_to_hbm [thread:$0]  %s659, 128, %s661, [#allocation4]
    $region25: #{tpu_custom_call.1} parent=1 // pred_fallthru
      _
    // Predicated region
    $region26: #{tpu_custom_call.1} parent=1 // pred_check
      _
    $region27: #{tpu_custom_call.1} parent=1 // pred_check_branch
      %665 = sbr.rel (0) target = $region29
    $region28: #{tpu_custom_call.1} parent=1 // pred_region
      %667 = dma.done [#allocation4], 128
    $region29: #{tpu_custom_call.1} parent=1 // pred_fallthru
      _
    %668 = vsyncpa [#allocation3], 1
    %669 = vsyncpa [#allocation6], 1
    %670 = vsyncpa [#allocation4], 1

</llo_original>
